<compile_context>
chip_gen: v7x
topology: tpu7x:2x2x1
jax: 0.10.0
libtpu: 0.0.40
codegen_flags: <defaults>
</compile_context>

<pallas_src>
import math
import functools

import jax
import jax.numpy as jnp
from jax.experimental import pallas as pl
from jax.experimental.pallas import tpu as pltpu

# ---------------- CPReLU constants (init = 0.25, per the module) -------------
_CPRELU_INIT = 0.25
_POST_MEAN = (1.0 - _CPRELU_INIT) / math.sqrt(2.0 * math.pi)
_POST_EX2 = (1.0 + _CPRELU_INIT ** 2) / 2.0
_POST_STDV = math.sqrt(_POST_EX2 - _POST_MEAN ** 2)


def _round_up(v, m):
    return ((v + m - 1) // m) * m


def _prelu(x, alpha):
    return jnp.where(x >= 0, x, alpha * x)


# ------------------------------- Pallas kernel --------------------------------
def residue_block_kernel(x_ref,
                         w1s_ref, b1s_ref, a1_ref,
                         w2_ref, b2_ref, a2_ref,
                         w3_ref, b3_ref,
                         connT_ref, selfconnT_ref, a3_ref,
                         o_ref, *, tb, c1p, c3p, l_in_pad, out_const):
    cdt = w2_ref.dtype                 # matmul-operand dtype (bf16 or f32)
    x = x_ref[...]                     # (in_cp, tb * L_in_p), batch in lanes

    # Fused first stage: [w1 ; ws] @ x.
    # Rows [0:c1p)  -> residue conv1 output, rows [c1p:) -> shortcut conv output.
    h0 = jnp.dot(w1s_ref[...], x, preferred_element_type=jnp.float32) + b1s_ref[...]
    p1 = _prelu(h0[:c1p], a1_ref[...])         # CPReLU-1 affine folded into w2/b2
    s = h0[c1p:]                               # (c3p, tb*L_in_p), f32

    p2 = _prelu(
        jnp.dot(w2_ref[...], p1.astype(cdt), preferred_element_type=jnp.float32)
        + b2_ref[...], a2_ref[...])            # CPReLU-2 affine folded into w3/b3
    z3 = (jnp.dot(w3_ref[...], p2.astype(cdt), preferred_element_type=jnp.float32)
          + b3_ref[...])

    # Single lanes->sublanes relayout for BOTH mesh contractions.
    zs = jnp.concatenate([z3, s], axis=0).astype(cdt)       # (2*c3p, tb*L_in_p)
    zs = zs.reshape(2 * c3p * tb, l_in_pad)

    rm = jnp.dot(zs[: c3p * tb], connT_ref[...], preferred_element_type=jnp.float32)
    sm = jnp.dot(zs[c3p * tb:], selfconnT_ref[...], preferred_element_type=jnp.float32)

    # Epilogue: CPReLU-3 affine and residue/shortcut scales are pre-folded into
    # connT / selfconnT / out_const -> just prelu + add + const here.
    o_ref[...] = _prelu(rm, a3_ref[...]) + sm + out_const


# ------------------------------ wrapper ---------------------------------------
def residue_block_forward(x, params, conn, self_conn, residue_ratio,
                          *, compute_dtype=jnp.bfloat16,
                          target_lanes=16384, vmem_budget_bytes=24 << 20):
    """x: (B, C_in, L_in) float32. Returns (B, C_out3, L_out) float32."""
    B, in_c, L_in = x.shape
    w1, b1, a1, w2, b2, a2, w3, b3, a3, ws, bs = params
    c1, c2, c3 = w1.shape[0], w2.shape[0], w3.shape[0]
    L_out = conn.shape[0]

    rr_s = math.sqrt(residue_ratio)
    sr_s = math.sqrt(1.0 - residue_ratio)
    mu, sigma = _POST_MEAN, _POST_STDV  # identical for every CPReLU (init=0.25)

    # ---- fold CPReLU affines and output scales (BEFORE any dtype cast) ------
    w2f = w2 / sigma
    b2f = b2 - (mu / sigma) * jnp.sum(w2, axis=1, keepdims=True)
    w3f = w3 / sigma
    b3f = b3 - (mu / sigma) * jnp.sum(w3, axis=1, keepdims=True)
    connT_s = jnp.transpose(conn) * (rr_s / sigma)           # (L_in, L_out)
    selfconnT_s = jnp.transpose(self_conn) * sr_s            # (L_in, L_out)
    out_const = -rr_s * mu / sigma

    # ---- padding to TPU-friendly tiles ---------------------------------------
    in_cp = _round_up(in_c, 8)
    c1p, c2p, c3p = _round_up(c1, 8), _round_up(c2, 8), _round_up(c3, 8)
    L_in_p = _round_up(L_in, 128)
    L_out_128 = _round_up(L_out, 128)
    # Lane-dense 128-padded output slab only when padding waste is small.
    L_out_p = L_out_128 if L_out_128 <= 1.25 * L_out else L_out

    cbytes = jnp.dtype(compute_dtype).itemsize

    # ---- batch tile: big blocks, VMEM-budgeted, >= 2 grid steps when B >= 2 --
    tb = max(1, target_lanes // L_in_p)
    per_tb_bytes = (
        2 * in_cp * L_in_p * cbytes                 # x, double-buffered
        + 2 * c3p * L_out_p * 4                     # out, double-buffered
        + (2 * c1p + c2p + 4 * c3p) * L_in_p * 4    # f32 intermediates
        + 2 * c3p * L_in_p * cbytes                 # zs in compute dtype
        + 2 * c3p * L_out_p * 4)                    # rm + sm
    resident_bytes = (2 * L_in_p * L_out_p * cbytes
                      + ((c1p + c3p) * in_cp + c2p * c1p + c3p * c2p) * cbytes
                      + 4 * (c1p + c2p + 3 * c3p))
    tb = max(1, min(tb, (vmem_budget_bytes - resident_bytes) // max(per_tb_bytes, 1)))
    if B >= 2:
        tb = min(tb, -(-B // 2))       # keep >= 2 grid steps for v7x's 2 TCs
    tb = min(tb, B)
    G = -(-B // tb)
    tb = -(-B // G)                    # redistribute -> less padded-batch waste
    B_pad = G * tb

    def pad2(m, r, c):
        return jnp.pad(m, ((0, r - m.shape[0]), (0, c - m.shape[1])))

    # Fused [w1 ; ws] first-stage weight (both consume x).
    w1s = jnp.concatenate([pad2(w1, c1p, in_cp), pad2(ws, c3p, in_cp)], axis=0)
    b1s = jnp.concatenate([pad2(b1, c1p, 1), pad2(bs, c3p, 1)], axis=0)

    a1p = pad2(a1, c1p, 1)
    w2p = pad2(w2f, c2p, c1p)
    b2p = pad2(b2f, c2p, 1)
    a2p = pad2(a2, c2p, 1)
    w3p = pad2(w3f, c3p, c2p)
    b3p = pad2(b3f, c3p, 1)
    connTp = pad2(connT_s, L_in_p, L_out_p)
    selfconnTp = pad2(selfconnT_s, L_in_p, L_out_p)
    # alpha3 expanded to the (channel-major, batch-minor) row order of zs/rm.
    a3rows = jnp.repeat(pad2(a3, c3p, 1), tb, axis=0)         # (c3p*tb, 1)

    # Cast matmul operands AFTER folding; biases/alphas/epilogue stay f32.
    w1s = w1s.astype(compute_dtype)
    w2p = w2p.astype(compute_dtype)
    w3p = w3p.astype(compute_dtype)
    connTp = connTp.astype(compute_dtype)
    selfconnTp = selfconnTp.astype(compute_dtype)

    # x: (B, C, L) -> (C_in_pad, B_pad * L_in_pad), batch folded into lanes.
    # TODO(synk): when ResidueBlocks are stacked, keep this folded layout (and
    # the folded output slab) as the inter-block activation format so these
    # extra HBM transpose/pad passes disappear.
    xT = jnp.transpose(x, (1, 0, 2))                          # (C, B, L)
    xTp = jnp.pad(xT, ((0, in_cp - in_c), (0, B_pad - B), (0, L_in_p - L_in)))
    X = xTp.reshape(in_cp, B_pad * L_in_p).astype(compute_dtype)

    kernel = functools.partial(residue_block_kernel, tb=tb, c1p=c1p, c3p=c3p,
                               l_in_pad=L_in_p, out_const=out_const)

    inv = lambda shape: pl.BlockSpec(shape, lambda i: (0, 0))   # grid-invariant

    flops = (2 * B_pad * (c1p * in_cp + c2p * c1p + c3p * c2p + c3p * in_cp) * L_in_p
             + 4 * B_pad * c3p * L_in_p * L_out_p)
    bytes_accessed = int(X.size * cbytes + G * c3p * tb * L_out_p * 4
                         + (w1s.size + w2p.size + w3p.size
                            + connTp.size + selfconnTp.size) * cbytes)

    out2d = pl.pallas_call(
        kernel,
        out_shape=jax.ShapeDtypeStruct((G * c3p * tb, L_out_p), jnp.float32),
        grid_spec=pltpu.PrefetchScalarGridSpec(
            num_scalar_prefetch=0,
            grid=(G,),
            in_specs=[
                pl.BlockSpec((in_cp, tb * L_in_p), lambda i: (0, i)),  # x (streamed)
                inv((c1p + c3p, in_cp)), inv((c1p + c3p, 1)),          # w1||ws, b1||bs
                inv((c1p, 1)),                                         # alpha1
                inv((c2p, c1p)), inv((c2p, 1)), inv((c2p, 1)),         # w2,b2,alpha2
                inv((c3p, c2p)), inv((c3p, 1)),                        # w3,b3
                inv((L_in_p, L_out_p)),                                # conn^T (scaled)
                inv((L_in_p, L_out_p)),                                # self_conn^T (scaled)
                inv((c3p * tb, 1)),                                    # alpha3 rows
            ],
            out_specs=pl.BlockSpec((c3p * tb, L_out_p), lambda i: (i, 0)),
        ),
        compiler_params=pltpu.CompilerParams(
            dimension_semantics=("parallel",),
            vmem_limit_bytes=64 * 1024 * 1024),
        cost_estimate=pl.CostEstimate(flops=int(flops), transcendentals=0,
                                      bytes_accessed=bytes_accessed),
    )(X, w1s, b1s, a1p, w2p, b2p, a2p, w3p, b3p, connTp, selfconnTp, a3rows)

    # Rows of out2d are ordered (grid tile, channel, batch_in_tile).
    out = out2d.reshape(G, c3p, tb, L_out_p)
    out = jnp.transpose(out, (0, 2, 1, 3)).reshape(B_pad, c3p, L_out_p)
    return out[:B, :c3, :L_out]


# ------------------------- plain-JAX reference --------------------------------
def residue_block_reference(x, params, conn, self_conn, residue_ratio):
    w1, b1, a1, w2, b2, a2, w3, b3, a3, ws, bs = params
    rr_s = math.sqrt(residue_ratio)
    sr_s = math.sqrt(1.0 - residue_ratio)

    def conv1x1(v, w, b):  # v: (B, Cin, L)
        return jnp.einsum('oi,bil->bol', w, v) + b[None, :, :]

    def cprelu(v, a):
        y = jnp.where(v >= 0, v, a[None, :, :] * v)
        return (y - _POST_MEAN) / _POST_STDV

    def mesh(v, cm):  # v: (B, C, L_in), cm: (L_out, L_in)
        return jnp.einsum('ol,bcl->bco', cm, v)

    h = cprelu(conv1x1(x, w1, b1), a1)
    h = cprelu(conv1x1(h, w2, b2), a2)
    h = conv1x1(h, w3, b3)
    r = cprelu(mesh(h, conn), a3)
    s = mesh(conv1x1(x, ws, bs), self_conn)
    return sr_s * s + rr_s * r


# ---------------------- deterministic parameter init --------------------------
def make_conv1x1_weight(key, out_c, in_c):
    # matches Conv1d in the module: normal init, then per-output-channel L2 norm
    w = jax.random.normal(key, (out_c, in_c), dtype=jnp.float32)
    norm = jnp.sqrt(jnp.sum(w ** 2, axis=1, keepdims=True) + 1e-8)
    return w / norm


if __name__ == "__main__":
    key = jax.random.PRNGKey(0)
    keys = jax.random.split(key, 8)

    # small shapes consistent with the module
    B = 2
    in_channels = 4
    out_channels = 8
    in_size = 16     # L_in  (connection_matrix.shape[1])
    out_size = 12    # L_out (connection_matrix.shape[0])
    residue_ratio = 0.5

    out_c1 = int((out_channels - in_channels) * 0.3 + in_channels)   # 5
    out_c2 = int((out_channels - in_channels) * 0.6 + in_channels)   # 6
    out_c3 = int((out_channels - in_channels) * 1.0 + in_channels)   # 8

    # connection matrix (given to the module) and derived self-connection matrix
    conn = jax.random.uniform(keys[0], (out_size, in_size), dtype=jnp.float32)
    self_conn = (conn - jnp.max(conn, axis=1, keepdims=True) >= 0).astype(jnp.float32)

    # residue path params
    w1 = make_conv1x1_weight(keys[1], out_c1, in_channels)
    b1 = jnp.zeros((out_c1, 1), jnp.float32)
    a1 = jnp.full((out_c1, 1), _CPRELU_INIT, jnp.float32)
    w2 = make_conv1x1_weight(keys[2], out_c2, out_c1)
    b2 = jnp.zeros((out_c2, 1), jnp.float32)
    a2 = jnp.full((out_c2, 1), _CPRELU_INIT, jnp.float32)
    w3 = make_conv1x1_weight(keys[3], out_c3, out_c2)
    b3 = jnp.zeros((out_c3, 1), jnp.float32)
    a3 = jnp.full((out_c3, 1), _CPRELU_INIT, jnp.float32)
    # shortcut path params
    ws = make_conv1x1_weight(keys[4], out_c3, in_channels)
    bs = jnp.zeros((out_c3, 1), jnp.float32)

    params = (w1, b1, a1, w2, b2, a2, w3, b3, a3, ws, bs)

    x = jax.random.normal(keys[5], (B, in_channels, in_size), dtype=jnp.float32)

    ref = residue_block_reference(x, params, conn, self_conn, residue_ratio)

    # 1) f32 operand path: bit-tight check of the kernel structure/folding.
    out_f32 = residue_block_forward(x, params, conn, self_conn, residue_ratio,
                                    compute_dtype=jnp.float32)
    out_f32 = jax.block_until_ready(out_f32)
    assert out_f32.shape == (B, out_c3, out_size), out_f32.shape
    assert jnp.allclose(out_f32, ref, rtol=1e-3, atol=1e-3), \
        float(jnp.max(jnp.abs(out_f32 - ref)))

    # 2) bf16 operand path (default, MXU-native), f32 accumulation/epilogue.
    out_bf16 = residue_block_forward(x, params, conn, self_conn, residue_ratio,
                                     compute_dtype=jnp.bfloat16)
    out_bf16 = jax.block_until_ready(out_bf16)
    assert out_bf16.shape == (B, out_c3, out_size), out_bf16.shape
    assert jnp.allclose(out_bf16, ref, rtol=5e-2, atol=5e-2), \
        float(jnp.max(jnp.abs(out_bf16 - ref)))

    print("KERNEL_OK")
</pallas_src>

<mosaic_0001>
module attributes {stable_mosaic.version = 11 : i64} {
  func.func @residue_block_kernel(%arg0: i32, %arg1: memref<8x128xf32, #tpu.memory_space<vmem>>, %arg2: memref<16x8xf32, #tpu.memory_space<vmem>>, %arg3: memref<16x1xf32, #tpu.memory_space<vmem>>, %arg4: memref<8x1xf32, #tpu.memory_space<vmem>>, %arg5: memref<8x8xf32, #tpu.memory_space<vmem>>, %arg6: memref<8x1xf32, #tpu.memory_space<vmem>>, %arg7: memref<8x1xf32, #tpu.memory_space<vmem>>, %arg8: memref<8x8xf32, #tpu.memory_space<vmem>>, %arg9: memref<8x1xf32, #tpu.memory_space<vmem>>, %arg10: memref<128x12xf32, #tpu.memory_space<vmem>>, %arg11: memref<128x12xf32, #tpu.memory_space<vmem>>, %arg12: memref<8x1xf32, #tpu.memory_space<vmem>>, %arg13: memref<8x12xf32, #tpu.memory_space<vmem>>) attributes {dimension_semantics = [#tpu.dimension_semantics<parallel>], iteration_bounds = array<i64: 2>, scalar_prefetch = 0 : i64, scratch_operands = 0 : i64, tpu.core_type = #tpu.core_type<tc>, window_params = [{transform_indices = @transform_0, window_bounds = array<i64: 8, 128>}, {pipeline_mode = #tpu.pipeline_mode<synchronous>, transform_indices = @transform_1, window_bounds = array<i64: 16, 8>}, {pipeline_mode = #tpu.pipeline_mode<synchronous>, transform_indices = @transform_2, window_bounds = array<i64: 16, 1>}, {pipeline_mode = #tpu.pipeline_mode<synchronous>, transform_indices = @transform_3, window_bounds = array<i64: 8, 1>}, {pipeline_mode = #tpu.pipeline_mode<synchronous>, transform_indices = @transform_4, window_bounds = array<i64: 8, 8>}, {pipeline_mode = #tpu.pipeline_mode<synchronous>, transform_indices = @transform_5, window_bounds = array<i64: 8, 1>}, {pipeline_mode = #tpu.pipeline_mode<synchronous>, transform_indices = @transform_6, window_bounds = array<i64: 8, 1>}, {pipeline_mode = #tpu.pipeline_mode<synchronous>, transform_indices = @transform_7, window_bounds = array<i64: 8, 8>}, {pipeline_mode = #tpu.pipeline_mode<synchronous>, transform_indices = @transform_8, window_bounds = array<i64: 8, 1>}, {pipeline_mode = #tpu.pipeline_mode<synchronous>, transform_indices = @transform_9, window_bounds = array<i64: 128, 12>}, {pipeline_mode = #tpu.pipeline_mode<synchronous>, transform_indices = @transform_10, window_bounds = array<i64: 128, 12>}, {pipeline_mode = #tpu.pipeline_mode<synchronous>, transform_indices = @transform_11, window_bounds = array<i64: 8, 1>}, {transform_indices = @transform_12, window_bounds = array<i64: 8, 12>}]} {
    %c0 = arith.constant 0 : index
    %c0_0 = arith.constant 0 : index
    %0 = vector.load %arg1[%c0, %c0_0] : memref<8x128xf32, #tpu.memory_space<vmem>>, vector<8x128xf32>
    %c0_1 = arith.constant 0 : index
    %c0_2 = arith.constant 0 : index
    %1 = vector.load %arg2[%c0_1, %c0_2] : memref<16x8xf32, #tpu.memory_space<vmem>>, vector<16x8xf32>
    %cst = arith.constant dense<0.000000e+00> : vector<16x128xf32>
    %2 = tpu.matmul %1, %0, %cst {dimension_numbers = #tpu.dot_dimension_numbers<[1], [0], [0], [1], [0, 0, 1, 1], [], []>} : vector<16x8xf32>, vector<8x128xf32>, vector<16x128xf32> -> vector<16x128xf32>
    %c0_3 = arith.constant 0 : index
    %c0_4 = arith.constant 0 : index
    %3 = vector.load %arg3[%c0_3, %c0_4] : memref<16x1xf32, #tpu.memory_space<vmem>>, vector<16x1xf32>
    %4 = vector.broadcast %3 : vector<16x1xf32> to vector<16x128xf32>
    %5 = arith.addf %2, %4 : vector<16x128xf32>
    %6 = vector.extract_strided_slice %5 {offsets = [0, 0], sizes = [8, 128], strides = [1, 1]} : vector<16x128xf32> to vector<8x128xf32>
    %c0_5 = arith.constant 0 : index
    %c0_6 = arith.constant 0 : index
    %7 = vector.load %arg4[%c0_5, %c0_6] : memref<8x1xf32, #tpu.memory_space<vmem>>, vector<8x1xf32>
    %cst_7 = arith.constant 0.000000e+00 : f32
    %8 = vector.broadcast %cst_7 : f32 to vector<8x128xf32>
    %9 = arith.cmpf oge, %6, %8 : vector<8x128xf32>
    %10 = vector.broadcast %7 : vector<8x1xf32> to vector<8x128xf32>
    %11 = arith.mulf %10, %6 : vector<8x128xf32>
    %12 = arith.select %9, %6, %11 : vector<8x128xi1>, vector<8x128xf32>
    %13 = vector.extract_strided_slice %5 {offsets = [8, 0], sizes = [8, 128], strides = [1, 1]} : vector<16x128xf32> to vector<8x128xf32>
    %c0_8 = arith.constant 0 : index
    %c0_9 = arith.constant 0 : index
    %14 = vector.load %arg5[%c0_8, %c0_9] : memref<8x8xf32, #tpu.memory_space<vmem>>, vector<8x8xf32>
    %cst_10 = arith.constant dense<0.000000e+00> : vector<8x128xf32>
    %15 = tpu.matmul %14, %12, %cst_10 {dimension_numbers = #tpu.dot_dimension_numbers<[1], [0], [0], [1], [0, 0, 1, 1], [], []>} : vector<8x8xf32>, vector<8x128xf32>, vector<8x128xf32> -> vector<8x128xf32>
    %c0_11 = arith.constant 0 : index
    %c0_12 = arith.constant 0 : index
    %16 = vector.load %arg6[%c0_11, %c0_12] : memref<8x1xf32, #tpu.memory_space<vmem>>, vector<8x1xf32>
    %17 = vector.broadcast %16 : vector<8x1xf32> to vector<8x128xf32>
    %18 = arith.addf %15, %17 : vector<8x128xf32>
    %c0_13 = arith.constant 0 : index
    %c0_14 = arith.constant 0 : index
    %19 = vector.load %arg7[%c0_13, %c0_14] : memref<8x1xf32, #tpu.memory_space<vmem>>, vector<8x1xf32>
    %cst_15 = arith.constant 0.000000e+00 : f32
    %20 = vector.broadcast %cst_15 : f32 to vector<8x128xf32>
    %21 = arith.cmpf oge, %18, %20 : vector<8x128xf32>
    %22 = vector.broadcast %19 : vector<8x1xf32> to vector<8x128xf32>
    %23 = arith.mulf %22, %18 : vector<8x128xf32>
    %24 = arith.select %21, %18, %23 : vector<8x128xi1>, vector<8x128xf32>
    %c0_16 = arith.constant 0 : index
    %c0_17 = arith.constant 0 : index
    %25 = vector.load %arg8[%c0_16, %c0_17] : memref<8x8xf32, #tpu.memory_space<vmem>>, vector<8x8xf32>
    %cst_18 = arith.constant dense<0.000000e+00> : vector<8x128xf32>
    %26 = tpu.matmul %25, %24, %cst_18 {dimension_numbers = #tpu.dot_dimension_numbers<[1], [0], [0], [1], [0, 0, 1, 1], [], []>} : vector<8x8xf32>, vector<8x128xf32>, vector<8x128xf32> -> vector<8x128xf32>
    %c0_19 = arith.constant 0 : index
    %c0_20 = arith.constant 0 : index
    %27 = vector.load %arg9[%c0_19, %c0_20] : memref<8x1xf32, #tpu.memory_space<vmem>>, vector<8x1xf32>
    %28 = vector.broadcast %27 : vector<8x1xf32> to vector<8x128xf32>
    %29 = arith.addf %26, %28 : vector<8x128xf32>
    %30 = tpu.concatenate %29, %13 in 0 : vector<8x128xf32>, vector<8x128xf32> -> vector<16x128xf32>
    %31 = vector.extract_strided_slice %30 {offsets = [0, 0], sizes = [8, 128], strides = [1, 1]} : vector<16x128xf32> to vector<8x128xf32>
    %c0_21 = arith.constant 0 : index
    %c0_22 = arith.constant 0 : index
    %32 = vector.load %arg10[%c0_21, %c0_22] : memref<128x12xf32, #tpu.memory_space<vmem>>, vector<128x12xf32>
    %cst_23 = arith.constant dense<0.000000e+00> : vector<8x12xf32>
    %33 = tpu.matmul %31, %32, %cst_23 {dimension_numbers = #tpu.dot_dimension_numbers<[1], [0], [0], [1], [0, 0, 1, 1], [], []>} : vector<8x128xf32>, vector<128x12xf32>, vector<8x12xf32> -> vector<8x12xf32>
    %34 = vector.extract_strided_slice %30 {offsets = [8, 0], sizes = [8, 128], strides = [1, 1]} : vector<16x128xf32> to vector<8x128xf32>
    %c0_24 = arith.constant 0 : index
    %c0_25 = arith.constant 0 : index
    %35 = vector.load %arg11[%c0_24, %c0_25] : memref<128x12xf32, #tpu.memory_space<vmem>>, vector<128x12xf32>
    %cst_26 = arith.constant dense<0.000000e+00> : vector<8x12xf32>
    %36 = tpu.matmul %34, %35, %cst_26 {dimension_numbers = #tpu.dot_dimension_numbers<[1], [0], [0], [1], [0, 0, 1, 1], [], []>} : vector<8x128xf32>, vector<128x12xf32>, vector<8x12xf32> -> vector<8x12xf32>
    %c0_27 = arith.constant 0 : index
    %c0_28 = arith.constant 0 : index
    %37 = vector.load %arg12[%c0_27, %c0_28] : memref<8x1xf32, #tpu.memory_space<vmem>>, vector<8x1xf32>
    %cst_29 = arith.constant 0.000000e+00 : f32
    %38 = vector.broadcast %cst_29 : f32 to vector<8x12xf32>
    %39 = arith.cmpf oge, %33, %38 : vector<8x12xf32>
    %40 = vector.broadcast %37 : vector<8x1xf32> to vector<8x12xf32>
    %41 = arith.mulf %40, %33 : vector<8x12xf32>
    %42 = arith.select %39, %33, %41 : vector<8x12xi1>, vector<8x12xf32>
    %43 = arith.addf %42, %36 : vector<8x12xf32>
    %cst_30 = arith.constant -0.318331897 : f32
    %44 = vector.broadcast %cst_30 : f32 to vector<8x12xf32>
    %45 = arith.addf %43, %44 : vector<8x12xf32>
    %c0_31 = arith.constant 0 : index
    %c0_32 = arith.constant 0 : index
    %46 = vector.load %arg13[%c0_31, %c0_32] : memref<8x12xf32, #tpu.memory_space<vmem>>, vector<8x12xf32>
    tpu.vector_store %arg13[%c0_31, %c0_32], %45 {strides = array<i32>} : memref<8x12xf32, #tpu.memory_space<vmem>>, vector<8x12xf32>,
    return
  }
  func.func @transform_0(%arg0: i32) -> (i32, i32) {
    %c0_i32 = arith.constant 0 : i32
    %c0_i32_0 = arith.constant 0 : i32
    return %c0_i32, %arg0 : i32, i32
  }
  func.func @transform_1(%arg0: i32) -> (i32, i32) {
    %c0_i32 = arith.constant 0 : i32
    %c0_i32_0 = arith.constant 0 : i32
    %c0_i32_1 = arith.constant 0 : i32
    return %c0_i32, %c0_i32_0 : i32, i32
  }
  func.func @transform_2(%arg0: i32) -> (i32, i32) {
    %c0_i32 = arith.constant 0 : i32
    %c0_i32_0 = arith.constant 0 : i32
    %c0_i32_1 = arith.constant 0 : i32
    return %c0_i32, %c0_i32_0 : i32, i32
  }
  func.func @transform_3(%arg0: i32) -> (i32, i32) {
    %c0_i32 = arith.constant 0 : i32
    %c0_i32_0 = arith.constant 0 : i32
    %c0_i32_1 = arith.constant 0 : i32
    return %c0_i32, %c0_i32_0 : i32, i32
  }
  func.func @transform_4(%arg0: i32) -> (i32, i32) {
    %c0_i32 = arith.constant 0 : i32
    %c0_i32_0 = arith.constant 0 : i32
    %c0_i32_1 = arith.constant 0 : i32
    return %c0_i32, %c0_i32_0 : i32, i32
  }
  func.func @transform_5(%arg0: i32) -> (i32, i32) {
    %c0_i32 = arith.constant 0 : i32
    %c0_i32_0 = arith.constant 0 : i32
    %c0_i32_1 = arith.constant 0 : i32
    return %c0_i32, %c0_i32_0 : i32, i32
  }
  func.func @transform_6(%arg0: i32) -> (i32, i32) {
    %c0_i32 = arith.constant 0 : i32
    %c0_i32_0 = arith.constant 0 : i32
    %c0_i32_1 = arith.constant 0 : i32
    return %c0_i32, %c0_i32_0 : i32, i32
  }
  func.func @transform_7(%arg0: i32) -> (i32, i32) {
    %c0_i32 = arith.constant 0 : i32
    %c0_i32_0 = arith.constant 0 : i32
    %c0_i32_1 = arith.constant 0 : i32
    return %c0_i32, %c0_i32_0 : i32, i32
  }
  func.func @transform_8(%arg0: i32) -> (i32, i32) {
    %c0_i32 = arith.constant 0 : i32
    %c0_i32_0 = arith.constant 0 : i32
    %c0_i32_1 = arith.constant 0 : i32
    return %c0_i32, %c0_i32_0 : i32, i32
  }
  func.func @transform_9(%arg0: i32) -> (i32, i32) {
    %c0_i32 = arith.constant 0 : i32
    %c0_i32_0 = arith.constant 0 : i32
    %c0_i32_1 = arith.constant 0 : i32
    return %c0_i32, %c0_i32_0 : i32, i32
  }
  func.func @transform_10(%arg0: i32) -> (i32, i32) {
    %c0_i32 = arith.constant 0 : i32
    %c0_i32_0 = arith.constant 0 : i32
    %c0_i32_1 = arith.constant 0 : i32
    return %c0_i32, %c0_i32_0 : i32, i32
  }
  func.func @transform_11(%arg0: i32) -> (i32, i32) {
    %c0_i32 = arith.constant 0 : i32
    %c0_i32_0 = arith.constant 0 : i32
    %c0_i32_1 = arith.constant 0 : i32
    return %c0_i32, %c0_i32_0 : i32, i32
  }
  func.func @transform_12(%arg0: i32) -> (i32, i32) {
    %c0_i32 = arith.constant 0 : i32
    %c0_i32_0 = arith.constant 0 : i32
    return %arg0, %c0_i32 : i32, i32
  }
}

</mosaic_0001>

<llo_original>
// kernel: tpu_custom_call.1
$region0: #{tpu_custom_call.1}
  #allocation0 [shape = 'u32[]', space=smem, size = 0x4, offset = 0x4, fixed_abs, tag = 'smem constant byte address 0x4 - core index']
  #allocation1 [shape = 'u32[144,128]{1,0:T(1,128)}', space=vmem, size = 0x12000, scoped, tag = 'internal scratch']
  %s0 = inlined_call_operand.hbm [shape: f32[8,256], index: 0, kind: input, shape index: {}]
  %s1 = inlined_call_operand.hbm [shape: f32[16,8], index: 1, kind: input, shape index: {}]
  %s2 = inlined_call_operand.hbm [shape: f32[16,1], index: 2, kind: input, shape index: {}]
  %s3 = inlined_call_operand.hbm [shape: f32[8,1], index: 3, kind: input, shape index: {}]
  %s4 = inlined_call_operand.hbm [shape: f32[8,8], index: 4, kind: input, shape index: {}]
  %s5 = inlined_call_operand.hbm [shape: f32[8,1], index: 5, kind: input, shape index: {}]
  %s6 = inlined_call_operand.hbm [shape: f32[8,1], index: 6, kind: input, shape index: {}]
  %s7 = inlined_call_operand.hbm [shape: f32[8,8], index: 7, kind: input, shape index: {}]
  %s8 = inlined_call_operand.hbm [shape: f32[8,1], index: 8, kind: input, shape index: {}]
  %s9 = inlined_call_operand.hbm [shape: f32[128,12], index: 9, kind: input, shape index: {}]
  %s10 = inlined_call_operand.hbm [shape: f32[128,12], index: 10, kind: input, shape index: {}]
  %s11 = inlined_call_operand.hbm [shape: f32[8,1], index: 11, kind: input, shape index: {}]
  %s12 = inlined_call_operand.hbm [shape: f32[16,12], index: 12, kind: output, shape index: {}]
  %s13 = sld [smem:[#allocation0]]
  $region129: #{tpu_custom_call.1} parent=0
    _
  %s15 = ssub.s32 1, %s13
  %s16 = scalar_select 0, %s15, %s13
  $region1: #{tpu_custom_call.1} parent=0
    #allocation2 [shape = 'u8[8192]{0}', space=vmem, size = 0x2000, scoped, tag = 'input window, operand 0']
    #allocation3 [shape = 's32[2]{0}', space=sflag, size = 0x8, scoped, tag = 'scoped memory for tpu_custom_call.1']
    #allocation4 [shape = 's32[2]{0}', space=sflag, size = 0x8, scoped, tag = 'scoped memory for tpu_custom_call.1']
    #allocation5 [shape = 'u8[8192]{0}', space=vmem, size = 0x2000, scoped, tag = 'input window, operand 1, single buffered']
    #allocation6 [shape = 's32[1]{0}', space=sflag, size = 0x4, scoped, tag = 'scoped memory for tpu_custom_call.1']
    #allocation7 [shape = 'u8[8192]{0}', space=vmem, size = 0x2000, scoped, tag = 'input window, operand 2, single buffered']
    #allocation8 [shape = 'u8[4096]{0}', space=vmem, size = 0x1000, scoped, tag = 'input window, operand 3, single buffered']
    #allocation9 [shape = 's32[1]{0}', space=sflag, size = 0x4, scoped, tag = 'scoped memory for tpu_custom_call.1']
    #allocation10 [shape = 'u8[4096]{0}', space=vmem, size = 0x1000, scoped, tag = 'input window, operand 4, single buffered']
    #allocation11 [shape = 'u8[4096]{0}', space=vmem, size = 0x1000, scoped, tag = 'input window, operand 5, single buffered']
    #allocation12 [shape = 's32[1]{0}', space=sflag, size = 0x4, scoped, tag = 'scoped memory for tpu_custom_call.1']
    #allocation13 [shape = 'u8[4096]{0}', space=vmem, size = 0x1000, scoped, tag = 'input window, operand 6, single buffered']
    #allocation14 [shape = 'u8[4096]{0}', space=vmem, size = 0x1000, scoped, tag = 'input window, operand 7, single buffered']
    #allocation15 [shape = 's32[1]{0}', space=sflag, size = 0x4, scoped, tag = 'scoped memory for tpu_custom_call.1']
    #allocation16 [shape = 'u8[4096]{0}', space=vmem, size = 0x1000, scoped, tag = 'input window, operand 8, single buffered']
    #allocation17 [shape = 'u8[65536]{0}', space=vmem, size = 0x10000, scoped, tag = 'input window, operand 9, single buffered']
    #allocation18 [shape = 's32[1]{0}', space=sflag, size = 0x4, scoped, tag = 'scoped memory for tpu_custom_call.1']
    #allocation19 [shape = 'u8[65536]{0}', space=vmem, size = 0x10000, scoped, tag = 'input window, operand 10, single buffered']
    #allocation20 [shape = 'u8[4096]{0}', space=vmem, size = 0x1000, scoped, tag = 'input window, operand 11, single buffered']
    #allocation21 [shape = 's32[1]{0}', space=sflag, size = 0x4, scoped, tag = 'scoped memory for tpu_custom_call.1']
    #allocation22 [shape = 'u8[8192]{0}', space=vmem, size = 0x2000, scoped, tag = 'output window, operand 0']
    %17 = vsyncpa [#allocation3], 0
    %s18 = scalar_lea.sflag [#allocation3], 1
    %19 = vsyncpa %s18, 0
    %20 = vsyncpa [#allocation6], 0
    %21 = vsyncpa [#allocation9], 0
    %22 = vsyncpa [#allocation12], 0
    %23 = vsyncpa [#allocation15], 0
    %24 = vsyncpa [#allocation18], 0
    %25 = vsyncpa [#allocation21], 0
    %26 = vsyncpa [#allocation4], 0
    %s27 = scalar_lea.sflag [#allocation4], 1
    %28 = vsyncpa %s27, 0
    loop: start=0, step=1, limit=4
    $region2: #{tpu_custom_call.1} parent=1 // loop_pre_header
      _
    $region3: #{tpu_custom_call.1} parent=1 // loop_header
      %s30 = sphi 0, %s34
      %p31 = scmp.ge.s32.totalorder %s30, 4
      %s40 = sphi 0, %s42
      %s43 = sphi 0, %s40
      %s44 = sphi 0, %s43
      %s60 = sphi 0, %s44
      %s64 = sphi 0, %s64
      %s66 = sphi 0, %s64
      %s67 = sphi 0, %s66
      %s81 = sphi 0, %s67
      %s85 = sphi 0, %s85
      %s87 = sphi 0, %s85
      %s88 = sphi 0, %s87
      %s102 = sphi 0, %s88
      %s106 = sphi 0, %s106
      %s108 = sphi 0, %s106
      %s109 = sphi 0, %s108
      %s123 = sphi 0, %s109
      %s127 = sphi 0, %s127
      %s129 = sphi 0, %s127
      %s130 = sphi 0, %s129
      %s144 = sphi 0, %s130
      %s148 = sphi 0, %s148
      %s150 = sphi 0, %s148
      %s151 = sphi 0, %s150
      %s165 = sphi 0, %s151
      %s169 = sphi 0, %s169
      %s171 = sphi 0, %s169
      %s172 = sphi 0, %s171
      %s186 = sphi 0, %s172
      %s190 = sphi 0, %s190
      %s192 = sphi 0, %s190
      %s193 = sphi 0, %s192
      %s207 = sphi 0, %s193
      %s211 = sphi 0, %s211
      %s213 = sphi 0, %s211
      %s214 = sphi 0, %s213
      %s228 = sphi 0, %s214
      %s232 = sphi 0, %s232
      %s234 = sphi 0, %s232
      %s235 = sphi 0, %s234
      %s249 = sphi 0, %s235
      %s253 = sphi 0, %s253
      %s255 = sphi 0, %s253
      %s256 = sphi 0, %s255
      %s270 = sphi 0, %s256
      %s274 = sphi 0, %s274
      %s276 = sphi 0, %s274
      %s277 = sphi 0, %s276
      %s291 = sphi 0, %s277
      %s297 = sphi 0, %s299
      %s300 = sphi 0, %s297
      %s301 = sphi 0, %s300
      %s317 = sphi 0, %s301
    $region4: #{tpu_custom_call.1} parent=1 // loop_header_branch
      %33 = sbr.rel (%p31) target = $region8
    $region5: #{tpu_custom_call.1} parent=1 // loop_body
      %s35 = ssub.s32 %s30, 1
      %s36 = ssub.s32 %s30, 2
      %s37 = sadd.s32 %s30, 1
      %s38 = ssub.s32 %s30, %s37
      %p39 = scmp.eq.s32.totalorder %s38, 0
      %s41 = sadd.s32 %s40, 1
      %s42 = scalar_select %p39, %s40, %s41
      %p45 = pneg %p39
      %p46 = scmp.eq.s32.totalorder %s30, 1
      %p47 = por %p45, %p46
      %p48 = scmp.ne.s32.totalorder %s40, %s43
      %p49 = scmp.eq.s32.totalorder %s30, 0
      %p50 = por %p48, %p49
      %p51 = scmp.ne.s32.totalorder %s40, %s43
      %p52 = scmp.eq.s32.totalorder %s35, 1
      %p53 = por %p51, %p52
      %p54 = scmp.ne.s32.totalorder %s43, %s44
      %p55 = scmp.eq.s32.totalorder %s35, 0
      %p56 = por %p54, %p55
      %p57 = scmp.ne.s32.totalorder %s43, %s44
      %p58 = scmp.eq.s32.totalorder %s36, 1
      %p59 = por %p57, %p58
      %p61 = scmp.ne.s32.totalorder %s44, %s60
      %p62 = scmp.eq.s32.totalorder %s36, 0
      %p63 = por %p61, %p62
      %s65 = sadd.s32 %s64, 1
      %p68 = scmp.eq.s32.totalorder %s30, 1
      %p69 = scmp.ne.s32.totalorder %s64, %s66
      %p70 = scmp.eq.s32.totalorder %s30, 0
      %p71 = por %p69, %p70
      %p72 = scmp.ne.s32.totalorder %s64, %s66
      %p73 = scmp.eq.s32.totalorder %s35, 1
      %p74 = por %p72, %p73
      %p75 = scmp.ne.s32.totalorder %s66, %s67
      %p76 = scmp.eq.s32.totalorder %s35, 0
      %p77 = por %p75, %p76
      %p78 = scmp.ne.s32.totalorder %s66, %s67
      %p79 = scmp.eq.s32.totalorder %s36, 1
      %p80 = por %p78, %p79
      %p82 = scmp.ne.s32.totalorder %s67, %s81
      %p83 = scmp.eq.s32.totalorder %s36, 0
      %p84 = por %p82, %p83
      %s86 = sadd.s32 %s85, 1
      %p89 = scmp.eq.s32.totalorder %s30, 1
      %p90 = scmp.ne.s32.totalorder %s85, %s87
      %p91 = scmp.eq.s32.totalorder %s30, 0
      %p92 = por %p90, %p91
      %p93 = scmp.ne.s32.totalorder %s85, %s87
      %p94 = scmp.eq.s32.totalorder %s35, 1
      %p95 = por %p93, %p94
      %p96 = scmp.ne.s32.totalorder %s87, %s88
      %p97 = scmp.eq.s32.totalorder %s35, 0
      %p98 = por %p96, %p97
      %p99 = scmp.ne.s32.totalorder %s87, %s88
      %p100 = scmp.eq.s32.totalorder %s36, 1
      %p101 = por %p99, %p100
      %p103 = scmp.ne.s32.totalorder %s88, %s102
      %p104 = scmp.eq.s32.totalorder %s36, 0
      %p105 = por %p103, %p104
      %s107 = sadd.s32 %s106, 1
      %p110 = scmp.eq.s32.totalorder %s30, 1
      %p111 = scmp.ne.s32.totalorder %s106, %s108
      %p112 = scmp.eq.s32.totalorder %s30, 0
      %p113 = por %p111, %p112
      %p114 = scmp.ne.s32.totalorder %s106, %s108
      %p115 = scmp.eq.s32.totalorder %s35, 1
      %p116 = por %p114, %p115
      %p117 = scmp.ne.s32.totalorder %s108, %s109
      %p118 = scmp.eq.s32.totalorder %s35, 0
      %p119 = por %p117, %p118
      %p120 = scmp.ne.s32.totalorder %s108, %s109
      %p121 = scmp.eq.s32.totalorder %s36, 1
      %p122 = por %p120, %p121
      %p124 = scmp.ne.s32.totalorder %s109, %s123
      %p125 = scmp.eq.s32.totalorder %s36, 0
      %p126 = por %p124, %p125
      %s128 = sadd.s32 %s127, 1
      %p131 = scmp.eq.s32.totalorder %s30, 1
      %p132 = scmp.ne.s32.totalorder %s127, %s129
      %p133 = scmp.eq.s32.totalorder %s30, 0
      %p134 = por %p132, %p133
      %p135 = scmp.ne.s32.totalorder %s127, %s129
      %p136 = scmp.eq.s32.totalorder %s35, 1
      %p137 = por %p135, %p136
      %p138 = scmp.ne.s32.totalorder %s129, %s130
      %p139 = scmp.eq.s32.totalorder %s35, 0
      %p140 = por %p138, %p139
      %p141 = scmp.ne.s32.totalorder %s129, %s130
      %p142 = scmp.eq.s32.totalorder %s36, 1
      %p143 = por %p141, %p142
      %p145 = scmp.ne.s32.totalorder %s130, %s144
      %p146 = scmp.eq.s32.totalorder %s36, 0
      %p147 = por %p145, %p146
      %s149 = sadd.s32 %s148, 1
      %p152 = scmp.eq.s32.totalorder %s30, 1
      %p153 = scmp.ne.s32.totalorder %s148, %s150
      %p154 = scmp.eq.s32.totalorder %s30, 0
      %p155 = por %p153, %p154
      %p156 = scmp.ne.s32.totalorder %s148, %s150
      %p157 = scmp.eq.s32.totalorder %s35, 1
      %p158 = por %p156, %p157
      %p159 = scmp.ne.s32.totalorder %s150, %s151
      %p160 = scmp.eq.s32.totalorder %s35, 0
      %p161 = por %p159, %p160
      %p162 = scmp.ne.s32.totalorder %s150, %s151
      %p163 = scmp.eq.s32.totalorder %s36, 1
      %p164 = por %p162, %p163
      %p166 = scmp.ne.s32.totalorder %s151, %s165
      %p167 = scmp.eq.s32.totalorder %s36, 0
      %p168 = por %p166, %p167
      %s170 = sadd.s32 %s169, 1
      %p173 = scmp.eq.s32.totalorder %s30, 1
      %p174 = scmp.ne.s32.totalorder %s169, %s171
      %p175 = scmp.eq.s32.totalorder %s30, 0
      %p176 = por %p174, %p175
      %p177 = scmp.ne.s32.totalorder %s169, %s171
      %p178 = scmp.eq.s32.totalorder %s35, 1
      %p179 = por %p177, %p178
      %p180 = scmp.ne.s32.totalorder %s171, %s172
      %p181 = scmp.eq.s32.totalorder %s35, 0
      %p182 = por %p180, %p181
      %p183 = scmp.ne.s32.totalorder %s171, %s172
      %p184 = scmp.eq.s32.totalorder %s36, 1
      %p185 = por %p183, %p184
      %p187 = scmp.ne.s32.totalorder %s172, %s186
      %p188 = scmp.eq.s32.totalorder %s36, 0
      %p189 = por %p187, %p188
      %s191 = sadd.s32 %s190, 1
      %p194 = scmp.eq.s32.totalorder %s30, 1
      %p195 = scmp.ne.s32.totalorder %s190, %s192
      %p196 = scmp.eq.s32.totalorder %s30, 0
      %p197 = por %p195, %p196
      %p198 = scmp.ne.s32.totalorder %s190, %s192
      %p199 = scmp.eq.s32.totalorder %s35, 1
      %p200 = por %p198, %p199
      %p201 = scmp.ne.s32.totalorder %s192, %s193
      %p202 = scmp.eq.s32.totalorder %s35, 0
      %p203 = por %p201, %p202
      %p204 = scmp.ne.s32.totalorder %s192, %s193
      %p205 = scmp.eq.s32.totalorder %s36, 1
      %p206 = por %p204, %p205
      %p208 = scmp.ne.s32.totalorder %s193, %s207
      %p209 = scmp.eq.s32.totalorder %s36, 0
      %p210 = por %p208, %p209
      %s212 = sadd.s32 %s211, 1
      %p215 = scmp.eq.s32.totalorder %s30, 1
      %p216 = scmp.ne.s32.totalorder %s211, %s213
      %p217 = scmp.eq.s32.totalorder %s30, 0
      %p218 = por %p216, %p217
      %p219 = scmp.ne.s32.totalorder %s211, %s213
      %p220 = scmp.eq.s32.totalorder %s35, 1
      %p221 = por %p219, %p220
      %p222 = scmp.ne.s32.totalorder %s213, %s214
      %p223 = scmp.eq.s32.totalorder %s35, 0
      %p224 = por %p222, %p223
      %p225 = scmp.ne.s32.totalorder %s213, %s214
      %p226 = scmp.eq.s32.totalorder %s36, 1
      %p227 = por %p225, %p226
      %p229 = scmp.ne.s32.totalorder %s214, %s228
      %p230 = scmp.eq.s32.totalorder %s36, 0
      %p231 = por %p229, %p230
      %s233 = sadd.s32 %s232, 1
      %p236 = scmp.eq.s32.totalorder %s30, 1
      %p237 = scmp.ne.s32.totalorder %s232, %s234
      %p238 = scmp.eq.s32.totalorder %s30, 0
      %p239 = por %p237, %p238
      %p240 = scmp.ne.s32.totalorder %s232, %s234
      %p241 = scmp.eq.s32.totalorder %s35, 1
      %p242 = por %p240, %p241
      %p243 = scmp.ne.s32.totalorder %s234, %s235
      %p244 = scmp.eq.s32.totalorder %s35, 0
      %p245 = por %p243, %p244
      %p246 = scmp.ne.s32.totalorder %s234, %s235
      %p247 = scmp.eq.s32.totalorder %s36, 1
      %p248 = por %p246, %p247
      %p250 = scmp.ne.s32.totalorder %s235, %s249
      %p251 = scmp.eq.s32.totalorder %s36, 0
      %p252 = por %p250, %p251
      %s254 = sadd.s32 %s253, 1
      %p257 = scmp.eq.s32.totalorder %s30, 1
      %p258 = scmp.ne.s32.totalorder %s253, %s255
      %p259 = scmp.eq.s32.totalorder %s30, 0
      %p260 = por %p258, %p259
      %p261 = scmp.ne.s32.totalorder %s253, %s255
      %p262 = scmp.eq.s32.totalorder %s35, 1
      %p263 = por %p261, %p262
      %p264 = scmp.ne.s32.totalorder %s255, %s256
      %p265 = scmp.eq.s32.totalorder %s35, 0
      %p266 = por %p264, %p265
      %p267 = scmp.ne.s32.totalorder %s255, %s256
      %p268 = scmp.eq.s32.totalorder %s36, 1
      %p269 = por %p267, %p268
      %p271 = scmp.ne.s32.totalorder %s256, %s270
      %p272 = scmp.eq.s32.totalorder %s36, 0
      %p273 = por %p271, %p272
      %s275 = sadd.s32 %s274, 1
      %p278 = scmp.eq.s32.totalorder %s30, 1
      %p279 = scmp.ne.s32.totalorder %s274, %s276
      %p280 = scmp.eq.s32.totalorder %s30, 0
      %p281 = por %p279, %p280
      %p282 = scmp.ne.s32.totalorder %s274, %s276
      %p283 = scmp.eq.s32.totalorder %s35, 1
      %p284 = por %p282, %p283
      %p285 = scmp.ne.s32.totalorder %s276, %s277
      %p286 = scmp.eq.s32.totalorder %s35, 0
      %p287 = por %p285, %p286
      %p288 = scmp.ne.s32.totalorder %s276, %s277
      %p289 = scmp.eq.s32.totalorder %s36, 1
      %p290 = por %p288, %p289
      %p292 = scmp.ne.s32.totalorder %s277, %s291
      %p293 = scmp.eq.s32.totalorder %s36, 0
      %p294 = por %p292, %p293
      %s295 = ssub.s32 %s30, %s37
      %p296 = scmp.eq.s32.totalorder %s295, 0
      %s298 = sadd.s32 %s297, 1
      %s299 = scalar_select %p296, %s297, %s298
      %p302 = pneg %p296
      %p303 = scmp.eq.s32.totalorder %s30, 1
      %p304 = por %p302, %p303
      %p305 = scmp.ne.s32.totalorder %s297, %s300
      %p306 = scmp.eq.s32.totalorder %s30, 0
      %p307 = por %p305, %p306
      %p308 = scmp.ne.s32.totalorder %s297, %s300
      %p309 = scmp.eq.s32.totalorder %s35, 1
      %p310 = por %p308, %p309
      %p311 = scmp.ne.s32.totalorder %s300, %s301
      %p312 = scmp.eq.s32.totalorder %s35, 0
      %p313 = por %p311, %p312
      %p314 = scmp.ne.s32.totalorder %s300, %s301
      %p315 = scmp.eq.s32.totalorder %s36, 1
      %p316 = por %p314, %p315
      %p318 = scmp.ne.s32.totalorder %s301, %s317
      %p319 = scmp.eq.s32.totalorder %s36, 0
      %p320 = por %p318, %p319
      %p321 = scmp.le.s32.totalorder 1, %s30
      %p322 = scmp.lt.s32.totalorder %s30, 3
      %p323 = pnand %p321, %p322
      %p324 = pneg %p323
      // Predicated region
      $region9: #{tpu_custom_call.1} parent=5 // pred_check
        _
      $region10: #{tpu_custom_call.1} parent=5 // pred_check_branch
        %326 = sbr.rel (%p323) target = $region12
      $region11: #{tpu_custom_call.1} parent=5 // pred_region
        %s327 = ssub.s32 %s30, 1
        // Predicated region
        $region13: #{tpu_custom_call.1} parent=11 // pred_check
          %p328 = pneg %p77
        $region14: #{tpu_custom_call.1} parent=11 // pred_check_branch
          %330 = sbr.rel (%p328) target = $region16
        $region15: #{tpu_custom_call.1} parent=11 // pred_region
          %s332 = ssub.s32 256, 256
          %333 = vsyncadd [#allocation6], %s332
          %s334 = sshll.u32 [#allocation5], 4
          %s335 = int_to_ptr.vmem [resolvable:$true] %s334
          %340 = dma.hbm_to_vmem [thread:$0]  %s1, 256, %s335, [#allocation6], 128, 128, 8
        $region16: #{tpu_custom_call.1} parent=11 // pred_fallthru
          _
        // Predicated region
        $region17: #{tpu_custom_call.1} parent=11 // pred_check
          %p341 = pneg %p98
        $region18: #{tpu_custom_call.1} parent=11 // pred_check_branch
          %343 = sbr.rel (%p341) target = $region20
        $region19: #{tpu_custom_call.1} parent=11 // pred_region
          %s345 = ssub.s32 256, 256
          %346 = vsyncadd [#allocation6], %s345
          %s347 = sshll.u32 [#allocation7], 4
          %s348 = int_to_ptr.vmem [resolvable:$true] %s347
          %353 = dma.hbm_to_vmem [thread:$0]  %s2, 256, %s348, [#allocation6], 128, 128, 8
        $region20: #{tpu_custom_call.1} parent=11 // pred_fallthru
          _
        // Predicated region
        $region21: #{tpu_custom_call.1} parent=11 // pred_check
          %p354 = pneg %p119
        $region22: #{tpu_custom_call.1} parent=11 // pred_check_branch
          %356 = sbr.rel (%p354) target = $region24
        $region23: #{tpu_custom_call.1} parent=11 // pred_region
          %s358 = ssub.s32 128, 128
          %359 = vsyncadd [#allocation9], %s358
          %s361 = sshll.u32 [#allocation8], 4
          %s362 = int_to_ptr.vmem [resolvable:$true] %s361
          %364 = dma.hbm_to_vmem [thread:$0]  %s3, 128, %s362, [#allocation9]
        $region24: #{tpu_custom_call.1} parent=11 // pred_fallthru
          _
        // Predicated region
        $region25: #{tpu_custom_call.1} parent=11 // pred_check
          %p365 = pneg %p140
        $region26: #{tpu_custom_call.1} parent=11 // pred_check_branch
          %367 = sbr.rel (%p365) target = $region28
        $region27: #{tpu_custom_call.1} parent=11 // pred_region
          %s369 = ssub.s32 128, 128
          %370 = vsyncadd [#allocation9], %s369
          %s372 = sshll.u32 [#allocation10], 4
          %s373 = int_to_ptr.vmem [resolvable:$true] %s372
          %375 = dma.hbm_to_vmem [thread:$0]  %s4, 128, %s373, [#allocation9]
        $region28: #{tpu_custom_call.1} parent=11 // pred_fallthru
          _
        // Predicated region
        $region29: #{tpu_custom_call.1} parent=11 // pred_check
          %p376 = pneg %p161
        $region30: #{tpu_custom_call.1} parent=11 // pred_check_branch
          %378 = sbr.rel (%p376) target = $region32
        $region31: #{tpu_custom_call.1} parent=11 // pred_region
          %s380 = ssub.s32 128, 128
          %381 = vsyncadd [#allocation12], %s380
          %s383 = sshll.u32 [#allocation11], 4
          %s384 = int_to_ptr.vmem [resolvable:$true] %s383
          %386 = dma.hbm_to_vmem [thread:$0]  %s5, 128, %s384, [#allocation12]
        $region32: #{tpu_custom_call.1} parent=11 // pred_fallthru
          _
        // Predicated region
        $region33: #{tpu_custom_call.1} parent=11 // pred_check
          %p387 = pneg %p182
        $region34: #{tpu_custom_call.1} parent=11 // pred_check_branch
          %389 = sbr.rel (%p387) target = $region36
        $region35: #{tpu_custom_call.1} parent=11 // pred_region
          %s391 = ssub.s32 128, 128
          %392 = vsyncadd [#allocation12], %s391
          %s394 = sshll.u32 [#allocation13], 4
          %s395 = int_to_ptr.vmem [resolvable:$true] %s394
          %397 = dma.hbm_to_vmem [thread:$0]  %s6, 128, %s395, [#allocation12]
        $region36: #{tpu_custom_call.1} parent=11 // pred_fallthru
          _
        // Predicated region
        $region37: #{tpu_custom_call.1} parent=11 // pred_check
          %p398 = pneg %p203
        $region38: #{tpu_custom_call.1} parent=11 // pred_check_branch
          %400 = sbr.rel (%p398) target = $region40
        $region39: #{tpu_custom_call.1} parent=11 // pred_region
          %s402 = ssub.s32 128, 128
          %403 = vsyncadd [#allocation15], %s402
          %s405 = sshll.u32 [#allocation14], 4
          %s406 = int_to_ptr.vmem [resolvable:$true] %s405
          %408 = dma.hbm_to_vmem [thread:$0]  %s7, 128, %s406, [#allocation15]
        $region40: #{tpu_custom_call.1} parent=11 // pred_fallthru
          _
        // Predicated region
        $region41: #{tpu_custom_call.1} parent=11 // pred_check
          %p409 = pneg %p224
        $region42: #{tpu_custom_call.1} parent=11 // pred_check_branch
          %411 = sbr.rel (%p409) target = $region44
        $region43: #{tpu_custom_call.1} parent=11 // pred_region
          %s413 = ssub.s32 128, 128
          %414 = vsyncadd [#allocation15], %s413
          %s416 = sshll.u32 [#allocation16], 4
          %s417 = int_to_ptr.vmem [resolvable:$true] %s416
          %419 = dma.hbm_to_vmem [thread:$0]  %s8, 128, %s417, [#allocation15]
        $region44: #{tpu_custom_call.1} parent=11 // pred_fallthru
          _
        // Predicated region
        $region45: #{tpu_custom_call.1} parent=11 // pred_check
          %p420 = pneg %p245
        $region46: #{tpu_custom_call.1} parent=11 // pred_check_branch
          %422 = sbr.rel (%p420) target = $region48
        $region47: #{tpu_custom_call.1} parent=11 // pred_region
          %s424 = ssub.s32 2048, 2048
          %425 = vsyncadd [#allocation18], %s424
          %s426 = sshll.u32 [#allocation17], 4
          %s427 = int_to_ptr.vmem [resolvable:$true] %s426
          %432 = dma.hbm_to_vmem [thread:$0]  %s9, 2048, %s427, [#allocation18], 128, 128, 8
        $region48: #{tpu_custom_call.1} parent=11 // pred_fallthru
          _
        // Predicated region
        $region49: #{tpu_custom_call.1} parent=11 // pred_check
          %p433 = pneg %p266
        $region50: #{tpu_custom_call.1} parent=11 // pred_check_branch
          %435 = sbr.rel (%p433) target = $region52
        $region51: #{tpu_custom_call.1} parent=11 // pred_region
          %s437 = ssub.s32 2048, 2048
          %438 = vsyncadd [#allocation18], %s437
          %s439 = sshll.u32 [#allocation19], 4
          %s440 = int_to_ptr.vmem [resolvable:$true] %s439
          %445 = dma.hbm_to_vmem [thread:$0]  %s10, 2048, %s440, [#allocation18], 128, 128, 8
        $region52: #{tpu_custom_call.1} parent=11 // pred_fallthru
          _
        // Predicated region
        $region53: #{tpu_custom_call.1} parent=11 // pred_check
          %p446 = pneg %p287
        $region54: #{tpu_custom_call.1} parent=11 // pred_check_branch
          %448 = sbr.rel (%p446) target = $region56
        $region55: #{tpu_custom_call.1} parent=11 // pred_region
          %s450 = ssub.s32 128, 128
          %451 = vsyncadd [#allocation21], %s450
          %s453 = sshll.u32 [#allocation20], 4
          %s454 = int_to_ptr.vmem [resolvable:$true] %s453
          %456 = dma.hbm_to_vmem [thread:$0]  %s11, 128, %s454, [#allocation21]
        $region56: #{tpu_custom_call.1} parent=11 // pred_fallthru
          _
      $region12: #{tpu_custom_call.1} parent=5 // pred_fallthru
        _
      %p457 = scmp.lt.s32.totalorder %s30, 2
      // Predicated region
      $region57: #{tpu_custom_call.1} parent=5 // pred_check
        %p458 = pneg %p457
      $region58: #{tpu_custom_call.1} parent=5 // pred_check_branch
        %460 = sbr.rel (%p458) target = $region60
      $region59: #{tpu_custom_call.1} parent=5 // pred_region
        // Predicated region
        $region61: #{tpu_custom_call.1} parent=59 // pred_check
          %p461 = pneg %p50
        $region62: #{tpu_custom_call.1} parent=59 // pred_check_branch
          %463 = sbr.rel (%p461) target = $region64
        $region63: #{tpu_custom_call.1} parent=59 // pred_region
          %s464 = sand.u32 %s40, 1
          %s465 = scalar_lea.sflag [#allocation3], %s464
          %s466 = sand.u32 %s40, 1
          %s467 = smul.addr %s466, 8
          %s468 = scalar_lea.vmem [#allocation2], %s467
          %s470 = ssub.s32 128, 128
          %471 = vsyncadd %s465, %s470
          %s472 = smul.addr %s30, 128
          %s473 = scalar_lea.hbm %s0, %s472
          %s475 = sshll.u32 %s468, 4
          %s476 = int_to_ptr.vmem [resolvable:$true] %s475
          %478 = dma.hbm_to_vmem [thread:$0]  %s473, 128, %s476, %s465
        $region64: #{tpu_custom_call.1} parent=59 // pred_fallthru
          _
      $region60: #{tpu_custom_call.1} parent=5 // pred_fallthru
        _
      %p479 = scmp.le.s32.totalorder 1, %s30
      %p480 = scmp.lt.s32.totalorder %s30, 3
      %p481 = pnand %p479, %p480
      %p482 = pneg %p481
      // Predicated region
      $region65: #{tpu_custom_call.1} parent=5 // pred_check
        _
      $region66: #{tpu_custom_call.1} parent=5 // pred_check_branch
        %484 = sbr.rel (%p481) target = $region68
      $region67: #{tpu_custom_call.1} parent=5 // pred_region
        %s485 = ssub.s32 %s30, 1
        %s486 = sand.u32 %s43, 1
        %s487 = scalar_lea.sflag [#allocation3], %s486
        %s488 = sand.u32 %s43, 1
        %s489 = smul.addr %s488, 8
        %s490 = scalar_lea.vmem [#allocation2], %s489
        // Predicated region
        $region69: #{tpu_custom_call.1} parent=67 // pred_check
          %p491 = pneg %p56
        $region70: #{tpu_custom_call.1} parent=67 // pred_check_branch
          %493 = sbr.rel (%p491) target = $region72
        $region71: #{tpu_custom_call.1} parent=67 // pred_region
          %494 = dma.done %s487, 128
        $region72: #{tpu_custom_call.1} parent=67 // pred_fallthru
          _
        // Predicated region
        $region73: #{tpu_custom_call.1} parent=67 // pred_check
          %p495 = pneg %p77
        $region74: #{tpu_custom_call.1} parent=67 // pred_check_branch
          %497 = sbr.rel (%p495) target = $region76
        $region75: #{tpu_custom_call.1} parent=67 // pred_region
          %498 = dma.done [#allocation6], 256
        $region76: #{tpu_custom_call.1} parent=67 // pred_fallthru
          _
        // Predicated region
        $region77: #{tpu_custom_call.1} parent=67 // pred_check
          %p499 = pneg %p98
        $region78: #{tpu_custom_call.1} parent=67 // pred_check_branch
          %501 = sbr.rel (%p499) target = $region80
        $region79: #{tpu_custom_call.1} parent=67 // pred_region
          %502 = dma.done [#allocation6], 256
        $region80: #{tpu_custom_call.1} parent=67 // pred_fallthru
          _
        // Predicated region
        $region81: #{tpu_custom_call.1} parent=67 // pred_check
          %p503 = pneg %p119
        $region82: #{tpu_custom_call.1} parent=67 // pred_check_branch
          %505 = sbr.rel (%p503) target = $region84
        $region83: #{tpu_custom_call.1} parent=67 // pred_region
          %506 = dma.done [#allocation9], 128
        $region84: #{tpu_custom_call.1} parent=67 // pred_fallthru
          _
        // Predicated region
        $region85: #{tpu_custom_call.1} parent=67 // pred_check
          %p507 = pneg %p140
        $region86: #{tpu_custom_call.1} parent=67 // pred_check_branch
          %509 = sbr.rel (%p507) target = $region88
        $region87: #{tpu_custom_call.1} parent=67 // pred_region
          %510 = dma.done [#allocation9], 128
        $region88: #{tpu_custom_call.1} parent=67 // pred_fallthru
          _
        // Predicated region
        $region89: #{tpu_custom_call.1} parent=67 // pred_check
          %p511 = pneg %p161
        $region90: #{tpu_custom_call.1} parent=67 // pred_check_branch
          %513 = sbr.rel (%p511) target = $region92
        $region91: #{tpu_custom_call.1} parent=67 // pred_region
          %514 = dma.done [#allocation12], 128
        $region92: #{tpu_custom_call.1} parent=67 // pred_fallthru
          _
        // Predicated region
        $region93: #{tpu_custom_call.1} parent=67 // pred_check
          %p515 = pneg %p182
        $region94: #{tpu_custom_call.1} parent=67 // pred_check_branch
          %517 = sbr.rel (%p515) target = $region96
        $region95: #{tpu_custom_call.1} parent=67 // pred_region
          %518 = dma.done [#allocation12], 128
        $region96: #{tpu_custom_call.1} parent=67 // pred_fallthru
          _
        // Predicated region
        $region97: #{tpu_custom_call.1} parent=67 // pred_check
          %p519 = pneg %p203
        $region98: #{tpu_custom_call.1} parent=67 // pred_check_branch
          %521 = sbr.rel (%p519) target = $region100
        $region99: #{tpu_custom_call.1} parent=67 // pred_region
          %522 = dma.done [#allocation15], 128
        $region100: #{tpu_custom_call.1} parent=67 // pred_fallthru
          _
        // Predicated region
        $region101: #{tpu_custom_call.1} parent=67 // pred_check
          %p523 = pneg %p224
        $region102: #{tpu_custom_call.1} parent=67 // pred_check_branch
          %525 = sbr.rel (%p523) target = $region104
        $region103: #{tpu_custom_call.1} parent=67 // pred_region
          %526 = dma.done [#allocation15], 128
        $region104: #{tpu_custom_call.1} parent=67 // pred_fallthru
          _
        // Predicated region
        $region105: #{tpu_custom_call.1} parent=67 // pred_check
          %p527 = pneg %p245
        $region106: #{tpu_custom_call.1} parent=67 // pred_check_branch
          %529 = sbr.rel (%p527) target = $region108
        $region107: #{tpu_custom_call.1} parent=67 // pred_region
          %530 = dma.done [#allocation18], 2048
        $region108: #{tpu_custom_call.1} parent=67 // pred_fallthru
          _
        // Predicated region
        $region109: #{tpu_custom_call.1} parent=67 // pred_check
          %p531 = pneg %p266
        $region110: #{tpu_custom_call.1} parent=67 // pred_check_branch
          %533 = sbr.rel (%p531) target = $region112
        $region111: #{tpu_custom_call.1} parent=67 // pred_region
          %534 = dma.done [#allocation18], 2048
        $region112: #{tpu_custom_call.1} parent=67 // pred_fallthru
          _
        // Predicated region
        $region113: #{tpu_custom_call.1} parent=67 // pred_check
          %p535 = pneg %p287
        $region114: #{tpu_custom_call.1} parent=67 // pred_check_branch
          %537 = sbr.rel (%p535) target = $region116
        $region115: #{tpu_custom_call.1} parent=67 // pred_region
          %538 = dma.done [#allocation21], 128
        $region116: #{tpu_custom_call.1} parent=67 // pred_fallthru
          _
        %s539 = sand.u32 %s43, 1
        %s540 = scalar_lea.sflag [#allocation3], %s539
        %s541 = sand.u32 %s43, 1
        %s542 = smul.addr %s541, 8
        %s543 = scalar_lea.vmem [#allocation2], %s542
        %p544 = pneg %p56
        %p545 = pneg %p53
        %p546 = pneg %p77
        %p547 = pneg %p74
        %p548 = pneg %p98
        %p549 = pneg %p95
        %p550 = pneg %p119
        %p551 = pneg %p116
        %p552 = pneg %p140
        %p553 = pneg %p137
        %p554 = pneg %p161
        %p555 = pneg %p158
        %p556 = pneg %p182
        %p557 = pneg %p179
        %p558 = pneg %p203
        %p559 = pneg %p200
        %p560 = pneg %p224
        %p561 = pneg %p221
        %p562 = pneg %p245
        %p563 = pneg %p242
        %p564 = pneg %p266
        %p565 = pneg %p263
        %p566 = pneg %p287
        %p567 = pneg %p284
        %p568 = pneg %p313
        %p569 = pneg %p310
        %s570 = sand.u32 %s300, 1
        %s571 = scalar_lea.sflag [#allocation4], %s570
        %s572 = sand.u32 %s300, 1
        %s573 = smul.addr %s572, 8
        %s574 = scalar_lea.vmem [#allocation22], %s573
        %v575 = vld [vmem:[%s490] sm:$0xff]
        %v576 = vld [vmem:[#allocation5] sm:$0xff]
        %v577 = vld [vmem:[#allocation5 + $0x8] sm:$0xff]
        %v578 = vld [vmem:[#allocation7] sm:$0xff]
        %v579 = vld [vmem:[#allocation7 + $0x8] sm:$0xff]
        %581 = vset.pattern.permute.xlu0 0
        %582 = vperm.xlu0 %581, %v578
        %v583 = vpop.permute.xlu0 %582
        %586 = vset.pattern.permute.xlu0 0
        %587 = vperm.xlu0 %586, %v579
        %v588 = vpop.permute.xlu0 %587
        %vm590 = vcmask 64512
        %v592 = vsel %vm590, %v576, 0
        %v595 = vsel %vm590, %v577, 0
        %597 = vmatprep.subr.mxu0 0.0
        %598 = vmatpush1.msra.mxu0 %v575
        %599 = vmatprep.subr.mxu0 0.0
        %600 = vmatpush1.msra.mxu0 0.0
        %601 = vmatprep.subr.mxu0 0.0
        %602 = vmatpush1.msra.mxu0 0.0
        %603 = vmatprep.subr.mxu0 0.0
        %604 = vmatpush1.msra.mxu0 0.0
        %605 = vmatprep.subr.mxu0 0.0
        %606 = vmatpush1.msra.mxu0 0.0
        %607 = vmatprep.subr.mxu0 0.0
        %608 = vmatpush1.msra.mxu0 0.0
        %609 = vmatprep.subr.mxu0 0.0
        %610 = vmatpush1.msra.mxu0 0.0
        %611 = vmatprep.subr.mxu0 0.0
        %612 = vmatpush1.msra.mxu0 0.0
        %613 = vmatprep.subr.mxu0 0.0
        %614 = vmatpush1.msra.mxu0 0.0
        %615 = vmatprep.subr.mxu0 0.0
        %616 = vmatpush1.msra.mxu0 0.0
        %617 = vmatprep.subr.mxu0 0.0
        %618 = vmatpush1.msra.mxu0 0.0
        %619 = vmatprep.subr.mxu0 0.0
        %620 = vmatpush1.msra.mxu0 0.0
        %621 = vmatprep.subr.mxu0 0.0
        %622 = vmatpush1.msra.mxu0 0.0
        %623 = vmatprep.subr.mxu0 0.0
        %624 = vmatpush1.msra.mxu0 0.0
        %625 = vmatprep.subr.mxu0 0.0
        %626 = vmatpush1.msra.mxu0 0.0
        %627 = vmatprep.subr.mxu0 0.0
        %628 = vmatpush1.msra.mxu0 0.0
        %629 = vmatprep.subr.mxu0 0.0
        %630 = vmatpush1.msra.mxu0 0.0
        %631 = vmatprep.subr.mxu0 0.0
        %632 = vmatpush1.msra.mxu0 0.0
        %633 = vmatprep.subr.mxu0 0.0
        %634 = vmatpush1.msra.mxu0 0.0
        %635 = vmatprep.subr.mxu0 0.0
        %636 = vmatpush1.msra.mxu0 0.0
        %637 = vmatprep.subr.mxu0 0.0
        %638 = vmatpush1.msra.mxu0 0.0
        %639 = vmatprep.subr.mxu0 0.0
        %640 = vmatpush1.msra.mxu0 0.0
        %641 = vmatprep.subr.mxu0 0.0
        %642 = vmatpush1.msra.mxu0 0.0
        %643 = vmatprep.subr.mxu0 0.0
        %644 = vmatpush1.msra.mxu0 0.0
        %645 = vmatprep.subr.mxu0 0.0
        %646 = vmatpush1.msra.mxu0 0.0
        %647 = vmatprep.subr.mxu0 0.0
        %648 = vmatpush1.msra.mxu0 0.0
        %649 = vmatprep.subr.mxu0 0.0
        %650 = vmatpush1.msra.mxu0 0.0
        %651 = vmatprep.subr.mxu0 0.0
        %652 = vmatpush1.msra.mxu0 0.0
        %653 = vmatprep.subr.mxu0 0.0
        %654 = vmatpush1.msra.mxu0 0.0
        %655 = vmatprep.subr.mxu0 0.0
        %656 = vmatpush1.msra.mxu0 0.0
        %657 = vmatprep.subr.mxu0 0.0
        %658 = vmatpush1.msra.mxu0 0.0
        %659 = vmatprep.subr.mxu0 0.0
        %660 = vmatpush1.msra.mxu0 0.0
        %661 = vmatprep.mubr.f32.mxu0 0.0
        %662 = vmatmul.mubr.f32.gmra.mrb[0].mxu0 %v592
        %v663 = vpop.f32.mrb[0].mxu0
        %v664 = vadd.f32 %v583, %v663
        %v665 = vpop.f32.mrb[0].mxu0
        %666 = vmatprep.mubr.f32.mxu0 0.0
        %667 = vmatmul.mubr.f32.gmra.mrb[0].mxu0 %v595
        %v668 = vpop.f32.mrb[0].mxu0
        %v669 = vadd.f32 %v588, %v668
        %v670 = vpop.f32.mrb[0].mxu0
        %671 = vdwg.mxu0
        %v672 = vld [vmem:[#allocation8] sm:$0xff]
        %vm673 = vcmp.ge.f32.partialorder %v664, 0.0
        %675 = vset.pattern.permute.xlu0 0
        %676 = vperm.xlu0 %675, %v672
        %v677 = vpop.permute.xlu0 %676
        %v679 = vmul.f32 %v677, %v664
        %v680 = vsel %vm673, %v664, %v679
        %v681 = vld [vmem:[#allocation10] sm:$0xff]
        %v682 = vld [vmem:[#allocation11] sm:$0xff]
        %684 = vset.pattern.permute.xlu0 0
        %685 = vperm.xlu0 %684, %v682
        %v686 = vpop.permute.xlu0 %685
        %v689 = vsel %vm590, %v681, 0
        %691 = vmatprep.subr.mxu0 0.0
        %692 = vmatpush1.msra.mxu0 %v680
        %693 = vmatprep.subr.mxu0 0.0
        %694 = vmatpush1.msra.mxu0 0.0
        %695 = vmatprep.subr.mxu0 0.0
        %696 = vmatpush1.msra.mxu0 0.0
        %697 = vmatprep.subr.mxu0 0.0
        %698 = vmatpush1.msra.mxu0 0.0
        %699 = vmatprep.subr.mxu0 0.0
        %700 = vmatpush1.msra.mxu0 0.0
        %701 = vmatprep.subr.mxu0 0.0
        %702 = vmatpush1.msra.mxu0 0.0
        %703 = vmatprep.subr.mxu0 0.0
        %704 = vmatpush1.msra.mxu0 0.0
        %705 = vmatprep.subr.mxu0 0.0
        %706 = vmatpush1.msra.mxu0 0.0
        %707 = vmatprep.subr.mxu0 0.0
        %708 = vmatpush1.msra.mxu0 0.0
        %709 = vmatprep.subr.mxu0 0.0
        %710 = vmatpush1.msra.mxu0 0.0
        %711 = vmatprep.subr.mxu0 0.0
        %712 = vmatpush1.msra.mxu0 0.0
        %713 = vmatprep.subr.mxu0 0.0
        %714 = vmatpush1.msra.mxu0 0.0
        %715 = vmatprep.subr.mxu0 0.0
        %716 = vmatpush1.msra.mxu0 0.0
        %717 = vmatprep.subr.mxu0 0.0
        %718 = vmatpush1.msra.mxu0 0.0
        %719 = vmatprep.subr.mxu0 0.0
        %720 = vmatpush1.msra.mxu0 0.0
        %721 = vmatprep.subr.mxu0 0.0
        %722 = vmatpush1.msra.mxu0 0.0
        %723 = vmatprep.subr.mxu0 0.0
        %724 = vmatpush1.msra.mxu0 0.0
        %725 = vmatprep.subr.mxu0 0.0
        %726 = vmatpush1.msra.mxu0 0.0
        %727 = vmatprep.subr.mxu0 0.0
        %728 = vmatpush1.msra.mxu0 0.0
        %729 = vmatprep.subr.mxu0 0.0
        %730 = vmatpush1.msra.mxu0 0.0
        %731 = vmatprep.subr.mxu0 0.0
        %732 = vmatpush1.msra.mxu0 0.0
        %733 = vmatprep.subr.mxu0 0.0
        %734 = vmatpush1.msra.mxu0 0.0
        %735 = vmatprep.subr.mxu0 0.0
        %736 = vmatpush1.msra.mxu0 0.0
        %737 = vmatprep.subr.mxu0 0.0
        %738 = vmatpush1.msra.mxu0 0.0
        %739 = vmatprep.subr.mxu0 0.0
        %740 = vmatpush1.msra.mxu0 0.0
        %741 = vmatprep.subr.mxu0 0.0
        %742 = vmatpush1.msra.mxu0 0.0
        %743 = vmatprep.subr.mxu0 0.0
        %744 = vmatpush1.msra.mxu0 0.0
        %745 = vmatprep.subr.mxu0 0.0
        %746 = vmatpush1.msra.mxu0 0.0
        %747 = vmatprep.subr.mxu0 0.0
        %748 = vmatpush1.msra.mxu0 0.0
        %749 = vmatprep.subr.mxu0 0.0
        %750 = vmatpush1.msra.mxu0 0.0
        %751 = vmatprep.subr.mxu0 0.0
        %752 = vmatpush1.msra.mxu0 0.0
        %753 = vmatprep.subr.mxu0 0.0
        %754 = vmatpush1.msra.mxu0 0.0
        %755 = vmatprep.mubr.f32.mxu0 0.0
        %756 = vmatmul.mubr.f32.gmra.mrb[0].mxu0 %v689
        %v757 = vpop.f32.mrb[0].mxu0
        %v758 = vadd.f32 %v686, %v757
        %v759 = vpop.f32.mrb[0].mxu0
        %760 = vdwg.mxu0
        %v761 = vld [vmem:[#allocation13] sm:$0xff]
        %vm762 = vcmp.ge.f32.partialorder %v758, 0.0
        %764 = vset.pattern.permute.xlu0 0
        %765 = vperm.xlu0 %764, %v761
        %v766 = vpop.permute.xlu0 %765
        %v768 = vmul.f32 %v766, %v758
        %v769 = vsel %vm762, %v758, %v768
        %v770 = vld [vmem:[#allocation14] sm:$0xff]
        %v771 = vld [vmem:[#allocation16] sm:$0xff]
        %773 = vset.pattern.permute.xlu0 0
        %774 = vperm.xlu0 %773, %v771
        %v775 = vpop.permute.xlu0 %774
        %v778 = vsel %vm590, %v770, 0
        %780 = vmatprep.subr.mxu0 0.0
        %781 = vmatpush1.msra.mxu0 %v769
        %782 = vmatprep.subr.mxu0 0.0
        %783 = vmatpush1.msra.mxu0 0.0
        %784 = vmatprep.subr.mxu0 0.0
        %785 = vmatpush1.msra.mxu0 0.0
        %786 = vmatprep.subr.mxu0 0.0
        %787 = vmatpush1.msra.mxu0 0.0
        %788 = vmatprep.subr.mxu0 0.0
        %789 = vmatpush1.msra.mxu0 0.0
        %790 = vmatprep.subr.mxu0 0.0
        %791 = vmatpush1.msra.mxu0 0.0
        %792 = vmatprep.subr.mxu0 0.0
        %793 = vmatpush1.msra.mxu0 0.0
        %794 = vmatprep.subr.mxu0 0.0
        %795 = vmatpush1.msra.mxu0 0.0
        %796 = vmatprep.subr.mxu0 0.0
        %797 = vmatpush1.msra.mxu0 0.0
        %798 = vmatprep.subr.mxu0 0.0
        %799 = vmatpush1.msra.mxu0 0.0
        %800 = vmatprep.subr.mxu0 0.0
        %801 = vmatpush1.msra.mxu0 0.0
        %802 = vmatprep.subr.mxu0 0.0
        %803 = vmatpush1.msra.mxu0 0.0
        %804 = vmatprep.subr.mxu0 0.0
        %805 = vmatpush1.msra.mxu0 0.0
        %806 = vmatprep.subr.mxu0 0.0
        %807 = vmatpush1.msra.mxu0 0.0
        %808 = vmatprep.subr.mxu0 0.0
        %809 = vmatpush1.msra.mxu0 0.0
        %810 = vmatprep.subr.mxu0 0.0
        %811 = vmatpush1.msra.mxu0 0.0
        %812 = vmatprep.subr.mxu0 0.0
        %813 = vmatpush1.msra.mxu0 0.0
        %814 = vmatprep.subr.mxu0 0.0
        %815 = vmatpush1.msra.mxu0 0.0
        %816 = vmatprep.subr.mxu0 0.0
        %817 = vmatpush1.msra.mxu0 0.0
        %818 = vmatprep.subr.mxu0 0.0
        %819 = vmatpush1.msra.mxu0 0.0
        %820 = vmatprep.subr.mxu0 0.0
        %821 = vmatpush1.msra.mxu0 0.0
        %822 = vmatprep.subr.mxu0 0.0
        %823 = vmatpush1.msra.mxu0 0.0
        %824 = vmatprep.subr.mxu0 0.0
        %825 = vmatpush1.msra.mxu0 0.0
        %826 = vmatprep.subr.mxu0 0.0
        %827 = vmatpush1.msra.mxu0 0.0
        %828 = vmatprep.subr.mxu0 0.0
        %829 = vmatpush1.msra.mxu0 0.0
        %830 = vmatprep.subr.mxu0 0.0
        %831 = vmatpush1.msra.mxu0 0.0
        %832 = vmatprep.subr.mxu0 0.0
        %833 = vmatpush1.msra.mxu0 0.0
        %834 = vmatprep.subr.mxu0 0.0
        %835 = vmatpush1.msra.mxu0 0.0
        %836 = vmatprep.subr.mxu0 0.0
        %837 = vmatpush1.msra.mxu0 0.0
        %838 = vmatprep.subr.mxu0 0.0
        %839 = vmatpush1.msra.mxu0 0.0
        %840 = vmatprep.subr.mxu0 0.0
        %841 = vmatpush1.msra.mxu0 0.0
        %842 = vmatprep.subr.mxu0 0.0
        %843 = vmatpush1.msra.mxu0 0.0
        %844 = vmatprep.mubr.f32.mxu0 0.0
        %845 = vmatmul.mubr.f32.gmra.mrb[0].mxu0 %v778
        %v846 = vpop.f32.mrb[0].mxu0
        %v847 = vadd.f32 %v775, %v846
        %v848 = vpop.f32.mrb[0].mxu0
        %849 = vdwg.mxu0
        %v850 = vld [vmem:[#allocation17] sm:$0xff]
        %v851 = vld [vmem:[#allocation17 + $0x8] sm:$0xff]
        %v852 = vld [vmem:[#allocation17 + $0x10] sm:$0xff]
        %v853 = vld [vmem:[#allocation17 + $0x18] sm:$0xff]
        %v854 = vld [vmem:[#allocation17 + $0x20] sm:$0xff]
        %v855 = vld [vmem:[#allocation17 + $0x28] sm:$0xff]
        %v856 = vld [vmem:[#allocation17 + $0x30] sm:$0xff]
        %v857 = vld [vmem:[#allocation17 + $0x38] sm:$0xff]
        %v858 = vld [vmem:[#allocation17 + $0x40] sm:$0xff]
        %v859 = vld [vmem:[#allocation17 + $0x48] sm:$0xff]
        %v860 = vld [vmem:[#allocation17 + $0x50] sm:$0xff]
        %v861 = vld [vmem:[#allocation17 + $0x58] sm:$0xff]
        %v862 = vld [vmem:[#allocation17 + $0x60] sm:$0xff]
        %v863 = vld [vmem:[#allocation17 + $0x68] sm:$0xff]
        %v864 = vld [vmem:[#allocation17 + $0x70] sm:$0xff]
        %v865 = vld [vmem:[#allocation17 + $0x78] sm:$0xff]
        %866 = vmatprep.subr.mxu0 0.0
        %867 = vmatpush1.msra.mxu0 %v850
        %868 = vmatprep.subr.mxu0 0.0
        %869 = vmatpush1.msra.mxu0 %v851
        %870 = vmatprep.subr.mxu0 0.0
        %871 = vmatpush1.msra.mxu0 %v852
        %872 = vmatprep.subr.mxu0 0.0
        %873 = vmatpush1.msra.mxu0 %v853
        %874 = vmatprep.subr.mxu0 0.0
        %875 = vmatpush1.msra.mxu0 %v854
        %876 = vmatprep.subr.mxu0 0.0
        %877 = vmatpush1.msra.mxu0 %v855
        %878 = vmatprep.subr.mxu0 0.0
        %879 = vmatpush1.msra.mxu0 %v856
        %880 = vmatprep.subr.mxu0 0.0
        %881 = vmatpush1.msra.mxu0 %v857
        %882 = vmatprep.subr.mxu0 0.0
        %883 = vmatpush1.msra.mxu0 %v858
        %884 = vmatprep.subr.mxu0 0.0
        %885 = vmatpush1.msra.mxu0 %v859
        %886 = vmatprep.subr.mxu0 0.0
        %887 = vmatpush1.msra.mxu0 %v860
        %888 = vmatprep.subr.mxu0 0.0
        %889 = vmatpush1.msra.mxu0 %v861
        %890 = vmatprep.subr.mxu0 0.0
        %891 = vmatpush1.msra.mxu0 %v862
        %892 = vmatprep.subr.mxu0 0.0
        %893 = vmatpush1.msra.mxu0 %v863
        %894 = vmatprep.subr.mxu0 0.0
        %895 = vmatpush1.msra.mxu0 %v864
        %896 = vmatprep.subr.mxu0 0.0
        %897 = vmatpush1.msra.mxu0 %v865
        %898 = vmatprep.subr.mxu0 0.0
        %899 = vmatpush1.msra.mxu0 0.0
        %900 = vmatprep.subr.mxu0 0.0
        %901 = vmatpush1.msra.mxu0 0.0
        %902 = vmatprep.subr.mxu0 0.0
        %903 = vmatpush1.msra.mxu0 0.0
        %904 = vmatprep.subr.mxu0 0.0
        %905 = vmatpush1.msra.mxu0 0.0
        %906 = vmatprep.subr.mxu0 0.0
        %907 = vmatpush1.msra.mxu0 0.0
        %908 = vmatprep.subr.mxu0 0.0
        %909 = vmatpush1.msra.mxu0 0.0
        %910 = vmatprep.subr.mxu0 0.0
        %911 = vmatpush1.msra.mxu0 0.0
        %912 = vmatprep.subr.mxu0 0.0
        %913 = vmatpush1.msra.mxu0 0.0
        %914 = vmatprep.subr.mxu0 0.0
        %915 = vmatpush1.msra.mxu0 0.0
        %916 = vmatprep.subr.mxu0 0.0
        %917 = vmatpush1.msra.mxu0 0.0
        %918 = vmatprep.subr.mxu0 0.0
        %919 = vmatpush1.msra.mxu0 0.0
        %920 = vmatprep.subr.mxu0 0.0
        %921 = vmatpush1.msra.mxu0 0.0
        %922 = vmatprep.subr.mxu0 0.0
        %923 = vmatpush1.msra.mxu0 0.0
        %924 = vmatprep.subr.mxu0 0.0
        %925 = vmatpush1.msra.mxu0 0.0
        %926 = vmatprep.subr.mxu0 0.0
        %927 = vmatpush1.msra.mxu0 0.0
        %928 = vmatprep.subr.mxu0 0.0
        %929 = vmatpush1.msra.mxu0 0.0
        %930 = vmatprep.mubr.f32.mxu0 0.0
        %931 = vmatmul.mubr.f32.gmra.mrb[0].mxu0 %v847
        %v932 = vpop.f32.mrb[0].mxu0
        %v933 = vadd.f32 0.0, %v932
        %v934 = vpop.f32.mrb[0].mxu0
        %935 = vdwg.mxu0
        %v936 = vld [vmem:[#allocation19] sm:$0xff]
        %v937 = vld [vmem:[#allocation19 + $0x8] sm:$0xff]
        %v938 = vld [vmem:[#allocation19 + $0x10] sm:$0xff]
        %v939 = vld [vmem:[#allocation19 + $0x18] sm:$0xff]
        %v940 = vld [vmem:[#allocation19 + $0x20] sm:$0xff]
        %v941 = vld [vmem:[#allocation19 + $0x28] sm:$0xff]
        %v942 = vld [vmem:[#allocation19 + $0x30] sm:$0xff]
        %v943 = vld [vmem:[#allocation19 + $0x38] sm:$0xff]
        %v944 = vld [vmem:[#allocation19 + $0x40] sm:$0xff]
        %v945 = vld [vmem:[#allocation19 + $0x48] sm:$0xff]
        %v946 = vld [vmem:[#allocation19 + $0x50] sm:$0xff]
        %v947 = vld [vmem:[#allocation19 + $0x58] sm:$0xff]
        %v948 = vld [vmem:[#allocation19 + $0x60] sm:$0xff]
        %v949 = vld [vmem:[#allocation19 + $0x68] sm:$0xff]
        %v950 = vld [vmem:[#allocation19 + $0x70] sm:$0xff]
        %v951 = vld [vmem:[#allocation19 + $0x78] sm:$0xff]
        %952 = vmatprep.subr.mxu0 0.0
        %953 = vmatpush1.msra.mxu0 %v936
        %954 = vmatprep.subr.mxu0 0.0
        %955 = vmatpush1.msra.mxu0 %v937
        %956 = vmatprep.subr.mxu0 0.0
        %957 = vmatpush1.msra.mxu0 %v938
        %958 = vmatprep.subr.mxu0 0.0
        %959 = vmatpush1.msra.mxu0 %v939
        %960 = vmatprep.subr.mxu0 0.0
        %961 = vmatpush1.msra.mxu0 %v940
        %962 = vmatprep.subr.mxu0 0.0
        %963 = vmatpush1.msra.mxu0 %v941
        %964 = vmatprep.subr.mxu0 0.0
        %965 = vmatpush1.msra.mxu0 %v942
        %966 = vmatprep.subr.mxu0 0.0
        %967 = vmatpush1.msra.mxu0 %v943
        %968 = vmatprep.subr.mxu0 0.0
        %969 = vmatpush1.msra.mxu0 %v944
        %970 = vmatprep.subr.mxu0 0.0
        %971 = vmatpush1.msra.mxu0 %v945
        %972 = vmatprep.subr.mxu0 0.0
        %973 = vmatpush1.msra.mxu0 %v946
        %974 = vmatprep.subr.mxu0 0.0
        %975 = vmatpush1.msra.mxu0 %v947
        %976 = vmatprep.subr.mxu0 0.0
        %977 = vmatpush1.msra.mxu0 %v948
        %978 = vmatprep.subr.mxu0 0.0
        %979 = vmatpush1.msra.mxu0 %v949
        %980 = vmatprep.subr.mxu0 0.0
        %981 = vmatpush1.msra.mxu0 %v950
        %982 = vmatprep.subr.mxu0 0.0
        %983 = vmatpush1.msra.mxu0 %v951
        %984 = vmatprep.subr.mxu0 0.0
        %985 = vmatpush1.msra.mxu0 0.0
        %986 = vmatprep.subr.mxu0 0.0
        %987 = vmatpush1.msra.mxu0 0.0
        %988 = vmatprep.subr.mxu0 0.0
        %989 = vmatpush1.msra.mxu0 0.0
        %990 = vmatprep.subr.mxu0 0.0
        %991 = vmatpush1.msra.mxu0 0.0
        %992 = vmatprep.subr.mxu0 0.0
        %993 = vmatpush1.msra.mxu0 0.0
        %994 = vmatprep.subr.mxu0 0.0
        %995 = vmatpush1.msra.mxu0 0.0
        %996 = vmatprep.subr.mxu0 0.0
        %997 = vmatpush1.msra.mxu0 0.0
        %998 = vmatprep.subr.mxu0 0.0
        %999 = vmatpush1.msra.mxu0 0.0
        %1000 = vmatprep.subr.mxu0 0.0
        %1001 = vmatpush1.msra.mxu0 0.0
        %1002 = vmatprep.subr.mxu0 0.0
        %1003 = vmatpush1.msra.mxu0 0.0
        %1004 = vmatprep.subr.mxu0 0.0
        %1005 = vmatpush1.msra.mxu0 0.0
        %1006 = vmatprep.subr.mxu0 0.0
        %1007 = vmatpush1.msra.mxu0 0.0
        %1008 = vmatprep.subr.mxu0 0.0
        %1009 = vmatpush1.msra.mxu0 0.0
        %1010 = vmatprep.subr.mxu0 0.0
        %1011 = vmatpush1.msra.mxu0 0.0
        %1012 = vmatprep.subr.mxu0 0.0
        %1013 = vmatpush1.msra.mxu0 0.0
        %1014 = vmatprep.subr.mxu0 0.0
        %1015 = vmatpush1.msra.mxu0 0.0
        %1016 = vmatprep.mubr.f32.mxu0 0.0
        %1017 = vmatmul.mubr.f32.gmra.mrb[0].mxu0 %v669
        %v1018 = vpop.f32.mrb[0].mxu0
        %v1019 = vadd.f32 0.0, %v1018
        %v1020 = vpop.f32.mrb[0].mxu0
        %1021 = vdwg.mxu0
        %v1022 = vld [vmem:[#allocation20] sm:$0xff]
        %vm1023 = vcmp.ge.f32.partialorder %v933, 0.0
        %1025 = vset.pattern.permute.xlu0 0
        %1026 = vperm.xlu0 %1025, %v1022
        %v1027 = vpop.permute.xlu0 %1026
        %v1029 = vmul.f32 %v1027, %v933
        %v1030 = vsel %vm1023, %v933, %v1029
        %v1031 = vadd.f32 %v1030, %v1019
        %v1032 = vadd.f32 %v1031, -0.3183319
        %vm1033 = vcmask 97280
        %1034 = vst.msk [vmem:[%s574] sm:$0xff] %vm1033, %v1032
        %s1035 = sand.u32 %s300, 1
        %s1036 = scalar_lea.sflag [#allocation4], %s1035
        %s1037 = sand.u32 %s300, 1
        %s1038 = smul.addr %s1037, 8
        %s1039 = scalar_lea.vmem [#allocation22], %s1038
        // Predicated region
        $region117: #{tpu_custom_call.1} parent=67 // pred_check
          %p1040 = pneg %p310
        $region118: #{tpu_custom_call.1} parent=67 // pred_check_branch
          %1042 = sbr.rel (%p1040) target = $region120
        $region119: #{tpu_custom_call.1} parent=67 // pred_region
          %s1044 = ssub.s32 128, 128
          %1045 = vsyncadd %s1036, %s1044
          %s1046 = smul.addr %s35, 128
          %s1047 = scalar_lea.hbm %s12, %s1046
          %s1049 = sshll.u32 %s1039, 4
          %s1050 = int_to_ptr.vmem [resolvable:$true] %s1049
          %1052 = dma.vmem_to_hbm [thread:$0]  %s1050, 128, %s1047, %s1036
        $region120: #{tpu_custom_call.1} parent=67 // pred_fallthru
          _
      $region68: #{tpu_custom_call.1} parent=5 // pred_fallthru
        _
      %p1053 = scmp.le.s32.totalorder 2, %s30
      // Predicated region
      $region121: #{tpu_custom_call.1} parent=5 // pred_check
        %p1054 = pneg %p1053
      $region122: #{tpu_custom_call.1} parent=5 // pred_check_branch
        %1056 = sbr.rel (%p1054) target = $region124
      $region123: #{tpu_custom_call.1} parent=5 // pred_region
        %s1057 = ssub.s32 %s30, 2
        // Predicated region
        $region125: #{tpu_custom_call.1} parent=123 // pred_check
          %p1058 = pneg %p316
        $region126: #{tpu_custom_call.1} parent=123 // pred_check_branch
          %1060 = sbr.rel (%p1058) target = $region128
        $region127: #{tpu_custom_call.1} parent=123 // pred_region
          %s1061 = sand.u32 %s301, 1
          %s1062 = scalar_lea.sflag [#allocation4], %s1061
          %s1063 = sand.u32 %s301, 1
          %s1064 = smul.addr %s1063, 8
          %s1065 = scalar_lea.vmem [#allocation22], %s1064
          %1066 = dma.done %s1062, 128
        $region128: #{tpu_custom_call.1} parent=123 // pred_fallthru
          _
      $region124: #{tpu_custom_call.1} parent=5 // pred_fallthru
        _
    $region6: #{tpu_custom_call.1} parent=1 // loop_footer
      %s34 = sadd.s32 1, %s30
    $region7: #{tpu_custom_call.1} parent=1 // loop_footer_branch
      %29 = sbr.rel target = $region3
    $region8: #{tpu_custom_call.1} parent=1 // loop_exit
      _
    %1067 = vsyncpa [#allocation3], 1
    %s1068 = scalar_lea.sflag [#allocation3], 1
    %1069 = vsyncpa %s1068, 1
    %1070 = vsyncpa [#allocation6], 1
    %1071 = vsyncpa [#allocation9], 1
    %1072 = vsyncpa [#allocation12], 1
    %1073 = vsyncpa [#allocation15], 1
    %1074 = vsyncpa [#allocation18], 1
    %1075 = vsyncpa [#allocation21], 1
    %1076 = vsyncpa [#allocation4], 1
    %s1077 = scalar_lea.sflag [#allocation4], 1
    %1078 = vsyncpa %s1077, 1

</llo_original>
